<compile_context>
chip_gen: v5e
topology: v5e:2x2
jax: 0.10.0
libtpu: 0.0.40
codegen_flags: <defaults>
</compile_context>

<pallas_src>
import jax
import jax.numpy as jnp
from jax.experimental import pallas as pl
from jax.experimental.pallas import tpu as pltpu


def _round_up(x, m):
    return (x + m - 1) // m * m


def _make_variable_gcn_kernel(n_layers):
    """Fused kernel: adj_ref, x_ref, wself_ref, wneigh_ref, b_ref, out_ref.

    wself_ref / wneigh_ref: (L, D, D) zero-padded weight stacks.
    b_ref: (L, 1, D) zero-padded bias stack.  x_ref/out_ref: (N, D), lane-dense.
    """

    def kernel(adj_ref, x_ref, wself_ref, wneigh_ref, b_ref, out_ref):
        adj = adj_ref[...]
        x = x_ref[...]

        for i in range(n_layers):                 # Python-unrolled: activations stay in vregs
            w_self = wself_ref[i]                 # (D, D), static first-axis index -> zero-cost carve
            w_neigh = wneigh_ref[i]               # (D, D)
            b = b_ref[i]                          # (1, D)

            ax = jnp.dot(adj, x, preferred_element_type=jnp.float32)       # (N, D)
            z = (jnp.dot(x, w_self, preferred_element_type=jnp.float32)
                 + jnp.dot(ax, w_neigh, preferred_element_type=jnp.float32)
                 + b)

            if i < n_layers - 1:
                # nn.ReLU
                z = jnp.maximum(z, 0.0)
                # F.normalize(z, p=2, dim=1), torch eps=1e-12:
                #   z * rsqrt(max(sumsq, 1e-24)) == z / max(sqrt(sumsq), 1e-12)
                sumsq = jnp.sum(z * z, axis=1, keepdims=True)
                z = z * jax.lax.rsqrt(jnp.maximum(sumsq, 1e-24))

            x = z

        out_ref[...] = x.astype(out_ref.dtype)

    return kernel


def variable_gcn_forward(adj, feats, params):
    """Fused forward pass. params: list of (W, b) with W:(2F, E), b:(1, E)."""
    n = feats.shape[0]
    n_layers = len(params)
    num_labels = params[-1][0].shape[1]

    dims_in = [w.shape[0] // 2 for (w, _) in params]
    dims_out = [w.shape[1] for (w, _) in params]
    d_pad = _round_up(max(dims_in + dims_out), 128)   # common lane-dense width

    # --- pack parameters into 3 lane-dense buffers (trace-time, free) ---
    ws_list, wn_list, b_list = [], [], []
    for (w, b) in params:
        f = w.shape[0] // 2
        e = w.shape[1]
        w_self = w[:f, :].astype(jnp.float32)
        w_neigh = w[f:, :].astype(jnp.float32)
        ws_list.append(jnp.zeros((d_pad, d_pad), jnp.float32).at[:f, :e].set(w_self))
        wn_list.append(jnp.zeros((d_pad, d_pad), jnp.float32).at[:f, :e].set(w_neigh))
        b_list.append(jnp.zeros((1, d_pad), jnp.float32).at[:, :e].set(b.astype(jnp.float32)))
    ws_packed = jnp.stack(ws_list)     # (L, D, D)
    wn_packed = jnp.stack(wn_list)     # (L, D, D)
    b_packed = jnp.stack(b_list)       # (L, 1, D)

    # Zero-pad input features to the common lane width.
    x_pad = jnp.zeros((n, d_pad), jnp.float32).at[:, :dims_in[0]].set(feats.astype(jnp.float32))
    adj_f32 = adj.astype(jnp.float32)

    # Advisory cost hint for XLA's scheduler around the custom call.
    flops = 0
    for f, e in zip(dims_in, dims_out):
        flops += 2 * n * n * f + 2 * 2 * n * f * e     # A@x + (self & neigh projections)
    bytes_accessed = 4 * (adj_f32.size + x_pad.size + ws_packed.size
                          + wn_packed.size + b_packed.size + n * d_pad)
    cost = pl.CostEstimate(flops=flops,
                           transcendentals=n * (n_layers - 1),
                           bytes_accessed=bytes_accessed)

    vmem = pl.BlockSpec(memory_space=pltpu.MemorySpace.VMEM)
    out_pad = pl.pallas_call(
        _make_variable_gcn_kernel(n_layers),
        out_shape=jax.ShapeDtypeStruct((n, d_pad), jnp.float32),
        in_specs=[vmem] * 5,
        out_specs=vmem,
        cost_estimate=cost,
    )(adj_f32, x_pad, ws_packed, wn_packed, b_packed)

    # Lane-dense kernel output; slice back to the real label width outside.
    return out_pad[:, :num_labels]


def init_variable_gcn_params(key, num_feats, num_hidden, num_labels, num_layers):
    """Deterministic init matching GraphConvolution.init_weights:
       W (2*in, out) ~ U(-stdv, stdv), b (1, out) ~ U(-stdv, stdv), stdv = 1/sqrt(out)."""
    dims = [(num_feats, num_hidden)]
    dims += [(num_hidden, num_hidden)] * (num_layers - 2)
    dims += [(num_hidden, num_labels)]
    params = []
    for (fin, fout) in dims:
        key, kw, kb = jax.random.split(key, 3)
        stdv = 1.0 / (fout ** 0.5)
        w = jax.random.uniform(kw, (2 * fin, fout), jnp.float32, -stdv, stdv)
        b = jax.random.uniform(kb, (1, fout), jnp.float32, -stdv, stdv)
        params.append((w, b))
    return params


def _reference_forward(adj, feats, params):
    """Pure-JAX mirror of the PyTorch forward (for a tolerance check)."""
    x = feats
    n_layers = len(params)
    for i, (w, b) in enumerate(params):
        ax = adj @ x
        z = jnp.concatenate([x, ax], axis=1) @ w + b
        if i < n_layers - 1:
            z = jnp.maximum(z, 0.0)
            norm = jnp.sqrt(jnp.sum(z * z, axis=1, keepdims=True))
            z = z / jnp.maximum(norm, 1e-12)
        x = z
    return x


if __name__ == "__main__":
    key = jax.random.PRNGKey(0)

    num_nodes = 16
    num_feats = 8
    num_hidden = 32
    num_labels = 8
    num_layers = 4

    k_adj, k_x, k_p = jax.random.split(key, 3)

    # Dense "mean aggregation" adjacency: random edges, row-normalized.
    raw = (jax.random.uniform(k_adj, (num_nodes, num_nodes)) > 0.5).astype(jnp.float32)
    raw = raw * (1.0 - jnp.eye(num_nodes))            # no self loops (concat keeps self term)
    deg = jnp.maximum(raw.sum(axis=1, keepdims=True), 1.0)
    adj = raw / deg

    feats = jax.random.normal(k_x, (num_nodes, num_feats), jnp.float32)

    params = init_variable_gcn_params(k_p, num_feats, num_hidden, num_labels, num_layers)

    probs = variable_gcn_forward(adj, feats, params)
    jax.block_until_ready(probs)

    assert probs.shape == (num_nodes, num_labels)
    assert probs.dtype == jnp.float32

    # Tolerance check against the pure-JAX reference (fp association differs slightly).
    ref = _reference_forward(adj, feats, params)
    assert jnp.allclose(probs, ref, atol=1e-4, rtol=1e-4), float(jnp.abs(probs - ref).max())

    print("KERNEL_OK")
</pallas_src>

<mosaic_0001>
module attributes {stable_mosaic.version = 11 : i64} {
  func.func @kernel(%arg0: memref<16x16xf32, #tpu.memory_space<vmem>>, %arg1: memref<16x128xf32, #tpu.memory_space<vmem>>, %arg2: memref<4x128x128xf32, #tpu.memory_space<vmem>>, %arg3: memref<4x128x128xf32, #tpu.memory_space<vmem>>, %arg4: memref<4x1x128xf32, #tpu.memory_space<vmem>>, %arg5: memref<16x128xf32, #tpu.memory_space<vmem>>) attributes {dimension_semantics = [], scalar_prefetch = 0 : i64, scratch_operands = 0 : i64, tpu.core_type = #tpu.core_type<tc>} {
    %c0 = arith.constant 0 : index
    %c0_0 = arith.constant 0 : index
    %0 = vector.load %arg0[%c0, %c0_0] : memref<16x16xf32, #tpu.memory_space<vmem>>, vector<16x16xf32>
    %c0_1 = arith.constant 0 : index
    %c0_2 = arith.constant 0 : index
    %1 = vector.load %arg1[%c0_1, %c0_2] : memref<16x128xf32, #tpu.memory_space<vmem>>, vector<16x128xf32>
    %c0_3 = arith.constant 0 : index
    %c0_4 = arith.constant 0 : index
    %c0_5 = arith.constant 0 : index
    %2 = vector.load %arg2[%c0_3, %c0_4, %c0_5] : memref<4x128x128xf32, #tpu.memory_space<vmem>>, vector<1x128x128xf32>
    %3 = vector.shape_cast %2 : vector<1x128x128xf32> to vector<128x128xf32>
    %c0_6 = arith.constant 0 : index
    %c0_7 = arith.constant 0 : index
    %c0_8 = arith.constant 0 : index
    %4 = vector.load %arg3[%c0_6, %c0_7, %c0_8] : memref<4x128x128xf32, #tpu.memory_space<vmem>>, vector<1x128x128xf32>
    %5 = vector.shape_cast %4 : vector<1x128x128xf32> to vector<128x128xf32>
    %c0_9 = arith.constant 0 : index
    %c0_10 = arith.constant 0 : index
    %c0_11 = arith.constant 0 : index
    %6 = vector.load %arg4[%c0_9, %c0_10, %c0_11] : memref<4x1x128xf32, #tpu.memory_space<vmem>>, vector<1x1x128xf32>
    %7 = vector.shape_cast %6 : vector<1x1x128xf32> to vector<1x128xf32>
    %cst = arith.constant dense<0.000000e+00> : vector<16x128xf32>
    %8 = tpu.matmul %0, %1, %cst {dimension_numbers = #tpu.dot_dimension_numbers<[1], [0], [0], [1], [0, 0, 1, 1], [], []>} : vector<16x16xf32>, vector<16x128xf32>, vector<16x128xf32> -> vector<16x128xf32>
    %cst_12 = arith.constant dense<0.000000e+00> : vector<16x128xf32>
    %9 = tpu.matmul %1, %3, %cst_12 {dimension_numbers = #tpu.dot_dimension_numbers<[1], [0], [0], [1], [0, 0, 1, 1], [], []>} : vector<16x128xf32>, vector<128x128xf32>, vector<16x128xf32> -> vector<16x128xf32>
    %cst_13 = arith.constant dense<0.000000e+00> : vector<16x128xf32>
    %10 = tpu.matmul %8, %5, %cst_13 {dimension_numbers = #tpu.dot_dimension_numbers<[1], [0], [0], [1], [0, 0, 1, 1], [], []>} : vector<16x128xf32>, vector<128x128xf32>, vector<16x128xf32> -> vector<16x128xf32>
    %11 = arith.addf %9, %10 : vector<16x128xf32>
    %12 = vector.broadcast %7 : vector<1x128xf32> to vector<16x128xf32>
    %13 = arith.addf %11, %12 : vector<16x128xf32>
    %cst_14 = arith.constant 0.000000e+00 : f32
    %14 = vector.broadcast %cst_14 : f32 to vector<16x128xf32>
    %15 = arith.maximumf %13, %14 : vector<16x128xf32>
    %16 = arith.mulf %15, %15 : vector<16x128xf32>
    %cst_15 = arith.constant dense<0.000000e+00> : vector<16xf32>
    %17 = vector.multi_reduction <add>, %16, %cst_15 [1] : vector<16x128xf32> to vector<16xf32>
    %18 = vector.shape_cast %17 : vector<16xf32> to vector<16x1xf32>
    %cst_16 = arith.constant 1.000000e-24 : f32
    %19 = vector.broadcast %cst_16 : f32 to vector<16x1xf32>
    %20 = arith.maximumf %18, %19 : vector<16x1xf32>
    %21 = math.rsqrt %20 : vector<16x1xf32>
    %22 = vector.broadcast %21 : vector<16x1xf32> to vector<16x128xf32>
    %23 = arith.mulf %15, %22 : vector<16x128xf32>
    %c1 = arith.constant 1 : index
    %c0_17 = arith.constant 0 : index
    %c0_18 = arith.constant 0 : index
    %24 = vector.load %arg2[%c1, %c0_17, %c0_18] : memref<4x128x128xf32, #tpu.memory_space<vmem>>, vector<1x128x128xf32>
    %25 = vector.shape_cast %24 : vector<1x128x128xf32> to vector<128x128xf32>
    %c1_19 = arith.constant 1 : index
    %c0_20 = arith.constant 0 : index
    %c0_21 = arith.constant 0 : index
    %26 = vector.load %arg3[%c1_19, %c0_20, %c0_21] : memref<4x128x128xf32, #tpu.memory_space<vmem>>, vector<1x128x128xf32>
    %27 = vector.shape_cast %26 : vector<1x128x128xf32> to vector<128x128xf32>
    %c1_22 = arith.constant 1 : index
    %c0_23 = arith.constant 0 : index
    %c0_24 = arith.constant 0 : index
    %28 = vector.load %arg4[%c1_22, %c0_23, %c0_24] : memref<4x1x128xf32, #tpu.memory_space<vmem>>, vector<1x1x128xf32>
    %29 = vector.shape_cast %28 : vector<1x1x128xf32> to vector<1x128xf32>
    %cst_25 = arith.constant dense<0.000000e+00> : vector<16x128xf32>
    %30 = tpu.matmul %0, %23, %cst_25 {dimension_numbers = #tpu.dot_dimension_numbers<[1], [0], [0], [1], [0, 0, 1, 1], [], []>} : vector<16x16xf32>, vector<16x128xf32>, vector<16x128xf32> -> vector<16x128xf32>
    %cst_26 = arith.constant dense<0.000000e+00> : vector<16x128xf32>
    %31 = tpu.matmul %23, %25, %cst_26 {dimension_numbers = #tpu.dot_dimension_numbers<[1], [0], [0], [1], [0, 0, 1, 1], [], []>} : vector<16x128xf32>, vector<128x128xf32>, vector<16x128xf32> -> vector<16x128xf32>
    %cst_27 = arith.constant dense<0.000000e+00> : vector<16x128xf32>
    %32 = tpu.matmul %30, %27, %cst_27 {dimension_numbers = #tpu.dot_dimension_numbers<[1], [0], [0], [1], [0, 0, 1, 1], [], []>} : vector<16x128xf32>, vector<128x128xf32>, vector<16x128xf32> -> vector<16x128xf32>
    %33 = arith.addf %31, %32 : vector<16x128xf32>
    %34 = vector.broadcast %29 : vector<1x128xf32> to vector<16x128xf32>
    %35 = arith.addf %33, %34 : vector<16x128xf32>
    %cst_28 = arith.constant 0.000000e+00 : f32
    %36 = vector.broadcast %cst_28 : f32 to vector<16x128xf32>
    %37 = arith.maximumf %35, %36 : vector<16x128xf32>
    %38 = arith.mulf %37, %37 : vector<16x128xf32>
    %cst_29 = arith.constant dense<0.000000e+00> : vector<16xf32>
    %39 = vector.multi_reduction <add>, %38, %cst_29 [1] : vector<16x128xf32> to vector<16xf32>
    %40 = vector.shape_cast %39 : vector<16xf32> to vector<16x1xf32>
    %cst_30 = arith.constant 1.000000e-24 : f32
    %41 = vector.broadcast %cst_30 : f32 to vector<16x1xf32>
    %42 = arith.maximumf %40, %41 : vector<16x1xf32>
    %43 = math.rsqrt %42 : vector<16x1xf32>
    %44 = vector.broadcast %43 : vector<16x1xf32> to vector<16x128xf32>
    %45 = arith.mulf %37, %44 : vector<16x128xf32>
    %c2 = arith.constant 2 : index
    %c0_31 = arith.constant 0 : index
    %c0_32 = arith.constant 0 : index
    %46 = vector.load %arg2[%c2, %c0_31, %c0_32] : memref<4x128x128xf32, #tpu.memory_space<vmem>>, vector<1x128x128xf32>
    %47 = vector.shape_cast %46 : vector<1x128x128xf32> to vector<128x128xf32>
    %c2_33 = arith.constant 2 : index
    %c0_34 = arith.constant 0 : index
    %c0_35 = arith.constant 0 : index
    %48 = vector.load %arg3[%c2_33, %c0_34, %c0_35] : memref<4x128x128xf32, #tpu.memory_space<vmem>>, vector<1x128x128xf32>
    %49 = vector.shape_cast %48 : vector<1x128x128xf32> to vector<128x128xf32>
    %c2_36 = arith.constant 2 : index
    %c0_37 = arith.constant 0 : index
    %c0_38 = arith.constant 0 : index
    %50 = vector.load %arg4[%c2_36, %c0_37, %c0_38] : memref<4x1x128xf32, #tpu.memory_space<vmem>>, vector<1x1x128xf32>
    %51 = vector.shape_cast %50 : vector<1x1x128xf32> to vector<1x128xf32>
    %cst_39 = arith.constant dense<0.000000e+00> : vector<16x128xf32>
    %52 = tpu.matmul %0, %45, %cst_39 {dimension_numbers = #tpu.dot_dimension_numbers<[1], [0], [0], [1], [0, 0, 1, 1], [], []>} : vector<16x16xf32>, vector<16x128xf32>, vector<16x128xf32> -> vector<16x128xf32>
    %cst_40 = arith.constant dense<0.000000e+00> : vector<16x128xf32>
    %53 = tpu.matmul %45, %47, %cst_40 {dimension_numbers = #tpu.dot_dimension_numbers<[1], [0], [0], [1], [0, 0, 1, 1], [], []>} : vector<16x128xf32>, vector<128x128xf32>, vector<16x128xf32> -> vector<16x128xf32>
    %cst_41 = arith.constant dense<0.000000e+00> : vector<16x128xf32>
    %54 = tpu.matmul %52, %49, %cst_41 {dimension_numbers = #tpu.dot_dimension_numbers<[1], [0], [0], [1], [0, 0, 1, 1], [], []>} : vector<16x128xf32>, vector<128x128xf32>, vector<16x128xf32> -> vector<16x128xf32>
    %55 = arith.addf %53, %54 : vector<16x128xf32>
    %56 = vector.broadcast %51 : vector<1x128xf32> to vector<16x128xf32>
    %57 = arith.addf %55, %56 : vector<16x128xf32>
    %cst_42 = arith.constant 0.000000e+00 : f32
    %58 = vector.broadcast %cst_42 : f32 to vector<16x128xf32>
    %59 = arith.maximumf %57, %58 : vector<16x128xf32>
    %60 = arith.mulf %59, %59 : vector<16x128xf32>
    %cst_43 = arith.constant dense<0.000000e+00> : vector<16xf32>
    %61 = vector.multi_reduction <add>, %60, %cst_43 [1] : vector<16x128xf32> to vector<16xf32>
    %62 = vector.shape_cast %61 : vector<16xf32> to vector<16x1xf32>
    %cst_44 = arith.constant 1.000000e-24 : f32
    %63 = vector.broadcast %cst_44 : f32 to vector<16x1xf32>
    %64 = arith.maximumf %62, %63 : vector<16x1xf32>
    %65 = math.rsqrt %64 : vector<16x1xf32>
    %66 = vector.broadcast %65 : vector<16x1xf32> to vector<16x128xf32>
    %67 = arith.mulf %59, %66 : vector<16x128xf32>
    %c3 = arith.constant 3 : index
    %c0_45 = arith.constant 0 : index
    %c0_46 = arith.constant 0 : index
    %68 = vector.load %arg2[%c3, %c0_45, %c0_46] : memref<4x128x128xf32, #tpu.memory_space<vmem>>, vector<1x128x128xf32>
    %69 = vector.shape_cast %68 : vector<1x128x128xf32> to vector<128x128xf32>
    %c3_47 = arith.constant 3 : index
    %c0_48 = arith.constant 0 : index
    %c0_49 = arith.constant 0 : index
    %70 = vector.load %arg3[%c3_47, %c0_48, %c0_49] : memref<4x128x128xf32, #tpu.memory_space<vmem>>, vector<1x128x128xf32>
    %71 = vector.shape_cast %70 : vector<1x128x128xf32> to vector<128x128xf32>
    %c3_50 = arith.constant 3 : index
    %c0_51 = arith.constant 0 : index
    %c0_52 = arith.constant 0 : index
    %72 = vector.load %arg4[%c3_50, %c0_51, %c0_52] : memref<4x1x128xf32, #tpu.memory_space<vmem>>, vector<1x1x128xf32>
    %73 = vector.shape_cast %72 : vector<1x1x128xf32> to vector<1x128xf32>
    %cst_53 = arith.constant dense<0.000000e+00> : vector<16x128xf32>
    %74 = tpu.matmul %0, %67, %cst_53 {dimension_numbers = #tpu.dot_dimension_numbers<[1], [0], [0], [1], [0, 0, 1, 1], [], []>} : vector<16x16xf32>, vector<16x128xf32>, vector<16x128xf32> -> vector<16x128xf32>
    %cst_54 = arith.constant dense<0.000000e+00> : vector<16x128xf32>
    %75 = tpu.matmul %67, %69, %cst_54 {dimension_numbers = #tpu.dot_dimension_numbers<[1], [0], [0], [1], [0, 0, 1, 1], [], []>} : vector<16x128xf32>, vector<128x128xf32>, vector<16x128xf32> -> vector<16x128xf32>
    %cst_55 = arith.constant dense<0.000000e+00> : vector<16x128xf32>
    %76 = tpu.matmul %74, %71, %cst_55 {dimension_numbers = #tpu.dot_dimension_numbers<[1], [0], [0], [1], [0, 0, 1, 1], [], []>} : vector<16x128xf32>, vector<128x128xf32>, vector<16x128xf32> -> vector<16x128xf32>
    %77 = arith.addf %75, %76 : vector<16x128xf32>
    %78 = vector.broadcast %73 : vector<1x128xf32> to vector<16x128xf32>
    %79 = arith.addf %77, %78 : vector<16x128xf32>
    %c0_56 = arith.constant 0 : index
    %c0_57 = arith.constant 0 : index
    %80 = vector.load %arg5[%c0_56, %c0_57] : memref<16x128xf32, #tpu.memory_space<vmem>>, vector<16x128xf32>
    tpu.vector_store %arg5[%c0_56, %c0_57], %79 {strides = array<i32>} : memref<16x128xf32, #tpu.memory_space<vmem>>, vector<16x128xf32>,
    return
  }
}

</mosaic_0001>

<llo_original>
// kernel: tpu_custom_call.1
$region0: #{tpu_custom_call.1}
  #allocation0 [shape = 'u32[]', space=smem, size = 0x4, offset = 0x4, fixed_abs, tag = 'smem constant byte address 0x4 - core index']
  #allocation1 [shape = 'u32[72,128]{1,0:T(1,128)}', space=vmem, size = 0x9000, scoped, tag = 'internal scratch']
  %s0 = inlined_call_operand.hbm [shape: f32[16,16], index: 0, kind: input, shape index: {}]
  %s1 = inlined_call_operand.hbm [shape: f32[16,128], index: 1, kind: input, shape index: {}]
  %s2 = inlined_call_operand.hbm [shape: f32[4,128,128], index: 2, kind: input, shape index: {}]
  %s3 = inlined_call_operand.hbm [shape: f32[4,128,128], index: 3, kind: input, shape index: {}]
  %s4 = inlined_call_operand.hbm [shape: f32[4,1,128], index: 4, kind: input, shape index: {}]
  %s5 = inlined_call_operand.hbm [shape: f32[16,128], index: 5, kind: output, shape index: {}]
  %s6 = sld [smem:[#allocation0]]
  $region50: #{tpu_custom_call.1} parent=0
    _
  %s8 = ssub.s32 1, %s6
  %s9 = scalar_select 0, %s8, %s6
  $region1: #{tpu_custom_call.1} parent=0
    #allocation2 [shape = 'u8[8192]{0}', space=vmem, size = 0x2000, scoped, tag = 'input window, operand 0, single buffered']
    #allocation3 [shape = 's32[1]{0}', space=sflag, size = 0x4, scoped, tag = 'scoped memory for tpu_custom_call.1']
    #allocation4 [shape = 's32[1]{0}', space=sflag, size = 0x4, scoped, tag = 'scoped memory for tpu_custom_call.1']
    #allocation5 [shape = 'u8[8192]{0}', space=vmem, size = 0x2000, scoped, tag = 'input window, operand 1, single buffered']
    #allocation6 [shape = 's32[1]{0}', space=sflag, size = 0x4, scoped, tag = 'scoped memory for tpu_custom_call.1']
    #allocation7 [shape = 'u8[262144]{0}', space=vmem, size = 0x40000, scoped, tag = 'input window, operand 2, single buffered']
    #allocation8 [shape = 'u8[262144]{0}', space=vmem, size = 0x40000, scoped, tag = 'input window, operand 3, single buffered']
    #allocation9 [shape = 's32[1]{0}', space=sflag, size = 0x4, scoped, tag = 'scoped memory for tpu_custom_call.1']
    #allocation10 [shape = 'u8[2048]{0}', space=vmem, size = 0x800, scoped, tag = 'input window, operand 4, single buffered']
    #allocation11 [shape = 'u8[8192]{0}', space=vmem, size = 0x2000, scoped, tag = 'output window, operand 0, single buffered']
    %10 = vsyncpa [#allocation3], 0
    %11 = vsyncpa [#allocation6], 0
    %12 = vsyncpa [#allocation9], 0
    %13 = vsyncpa [#allocation4], 0
    // Predicated region
    $region2: #{tpu_custom_call.1} parent=1 // pred_check
      _
    $region3: #{tpu_custom_call.1} parent=1 // pred_check_branch
      %15 = sbr.rel (0) target = $region5
    $region4: #{tpu_custom_call.1} parent=1 // pred_region
      %17 = vsyncadd [#allocation3], 0
      %s18 = sshll.u32 %s0, 4
      %s19 = int_to_ptr.hbm [resolvable:$true] %s18
      %s20 = sshll.u32 [#allocation2], 4
      %s21 = int_to_ptr.vmem [resolvable:$true] %s20
      %26 = dma.hbm_to_vmem [thread:$0]  %s19, 256, %s21, [#allocation3], 128, 128, 8
    $region5: #{tpu_custom_call.1} parent=1 // pred_fallthru
      _
    // Predicated region
    $region6: #{tpu_custom_call.1} parent=1 // pred_check
      _
    $region7: #{tpu_custom_call.1} parent=1 // pred_check_branch
      %28 = sbr.rel (0) target = $region9
    $region8: #{tpu_custom_call.1} parent=1 // pred_region
      %30 = vsyncadd [#allocation6], 0
      %s31 = sshll.u32 %s1, 4
      %s32 = int_to_ptr.hbm [resolvable:$true] %s31
      %s33 = sshll.u32 [#allocation5], 4
      %s34 = int_to_ptr.vmem [resolvable:$true] %s33
      %39 = dma.hbm_to_vmem [thread:$0]  %s32, 256, %s34, [#allocation6], 128, 128, 8
    $region9: #{tpu_custom_call.1} parent=1 // pred_fallthru
      _
    // Predicated region
    $region10: #{tpu_custom_call.1} parent=1 // pred_check
      _
    $region11: #{tpu_custom_call.1} parent=1 // pred_check_branch
      %41 = sbr.rel (0) target = $region13
    $region12: #{tpu_custom_call.1} parent=1 // pred_region
      %43 = vsyncadd [#allocation6], 0
      %s44 = sshll.u32 %s2, 4
      %s45 = int_to_ptr.hbm [resolvable:$true] %s44
      %s46 = sshll.u32 [#allocation7], 4
      %s47 = int_to_ptr.vmem [resolvable:$true] %s46
      %52 = dma.hbm_to_vmem [thread:$0]  %s45, 8192, %s47, [#allocation6], 128, 128, 8
    $region13: #{tpu_custom_call.1} parent=1 // pred_fallthru
      _
    // Predicated region
    $region14: #{tpu_custom_call.1} parent=1 // pred_check
      _
    $region15: #{tpu_custom_call.1} parent=1 // pred_check_branch
      %54 = sbr.rel (0) target = $region17
    $region16: #{tpu_custom_call.1} parent=1 // pred_region
      %56 = vsyncadd [#allocation9], 0
      %s57 = sshll.u32 %s3, 4
      %s58 = int_to_ptr.hbm [resolvable:$true] %s57
      %s59 = sshll.u32 [#allocation8], 4
      %s60 = int_to_ptr.vmem [resolvable:$true] %s59
      %65 = dma.hbm_to_vmem [thread:$0]  %s58, 8192, %s60, [#allocation9], 128, 128, 8
    $region17: #{tpu_custom_call.1} parent=1 // pred_fallthru
      _
    // Predicated region
    $region18: #{tpu_custom_call.1} parent=1 // pred_check
      _
    $region19: #{tpu_custom_call.1} parent=1 // pred_check_branch
      %67 = sbr.rel (0) target = $region21
    $region20: #{tpu_custom_call.1} parent=1 // pred_region
      %69 = vsyncadd [#allocation9], 0
      %s70 = sshll.u32 %s4, 4
      %s71 = int_to_ptr.hbm [resolvable:$true] %s70
      %s72 = sshll.u32 [#allocation10], 4
      %s73 = int_to_ptr.vmem [resolvable:$true] %s72
      %78 = dma.hbm_to_vmem [thread:$0]  %s71, 64, %s73, [#allocation9], 16, 16, 1
    $region21: #{tpu_custom_call.1} parent=1 // pred_fallthru
      _
    // Predicated region
    $region22: #{tpu_custom_call.1} parent=1 // pred_check
      _
    $region23: #{tpu_custom_call.1} parent=1 // pred_check_branch
      %80 = sbr.rel (0) target = $region25
    $region24: #{tpu_custom_call.1} parent=1 // pred_region
      %82 = dma.done [#allocation3], 256
    $region25: #{tpu_custom_call.1} parent=1 // pred_fallthru
      _
    // Predicated region
    $region26: #{tpu_custom_call.1} parent=1 // pred_check
      _
    $region27: #{tpu_custom_call.1} parent=1 // pred_check_branch
      %84 = sbr.rel (0) target = $region29
    $region28: #{tpu_custom_call.1} parent=1 // pred_region
      %86 = dma.done [#allocation6], 256
    $region29: #{tpu_custom_call.1} parent=1 // pred_fallthru
      _
    // Predicated region
    $region30: #{tpu_custom_call.1} parent=1 // pred_check
      _
    $region31: #{tpu_custom_call.1} parent=1 // pred_check_branch
      %88 = sbr.rel (0) target = $region33
    $region32: #{tpu_custom_call.1} parent=1 // pred_region
      %90 = dma.done [#allocation6], 8192
    $region33: #{tpu_custom_call.1} parent=1 // pred_fallthru
      _
    // Predicated region
    $region34: #{tpu_custom_call.1} parent=1 // pred_check
      _
    $region35: #{tpu_custom_call.1} parent=1 // pred_check_branch
      %92 = sbr.rel (0) target = $region37
    $region36: #{tpu_custom_call.1} parent=1 // pred_region
      %94 = dma.done [#allocation9], 8192
    $region37: #{tpu_custom_call.1} parent=1 // pred_fallthru
      _
    // Predicated region
    $region38: #{tpu_custom_call.1} parent=1 // pred_check
      _
    $region39: #{tpu_custom_call.1} parent=1 // pred_check_branch
      %96 = sbr.rel (0) target = $region41
    $region40: #{tpu_custom_call.1} parent=1 // pred_region
      %98 = dma.done [#allocation9], 64
    $region41: #{tpu_custom_call.1} parent=1 // pred_fallthru
      _
    %v99 = vld [vmem:[#allocation2] sm:$0xff]
    %v100 = vld [vmem:[#allocation2 + $0x8] sm:$0xff]
    %v101 = vld [vmem:[#allocation5] sm:$0xff]
    %v102 = vld [vmem:[#allocation5 + $0x8] sm:$0xff]
    %v103 = vld [vmem:[#allocation7] sm:$0xff]
    %v104 = vld [vmem:[#allocation7 + $0x8] sm:$0xff]
    %v105 = vld [vmem:[#allocation7 + $0x10] sm:$0xff]
    %v106 = vld [vmem:[#allocation7 + $0x18] sm:$0xff]
    %v107 = vld [vmem:[#allocation7 + $0x20] sm:$0xff]
    %v108 = vld [vmem:[#allocation7 + $0x28] sm:$0xff]
    %v109 = vld [vmem:[#allocation7 + $0x30] sm:$0xff]
    %v110 = vld [vmem:[#allocation7 + $0x38] sm:$0xff]
    %v111 = vld [vmem:[#allocation7 + $0x40] sm:$0xff]
    %v112 = vld [vmem:[#allocation7 + $0x48] sm:$0xff]
    %v113 = vld [vmem:[#allocation7 + $0x50] sm:$0xff]
    %v114 = vld [vmem:[#allocation7 + $0x58] sm:$0xff]
    %v115 = vld [vmem:[#allocation7 + $0x60] sm:$0xff]
    %v116 = vld [vmem:[#allocation7 + $0x68] sm:$0xff]
    %v117 = vld [vmem:[#allocation7 + $0x70] sm:$0xff]
    %v118 = vld [vmem:[#allocation7 + $0x78] sm:$0xff]
    %v119 = vld [vmem:[#allocation8] sm:$0xff]
    %v120 = vld [vmem:[#allocation8 + $0x8] sm:$0xff]
    %v121 = vld [vmem:[#allocation8 + $0x10] sm:$0xff]
    %v122 = vld [vmem:[#allocation8 + $0x18] sm:$0xff]
    %v123 = vld [vmem:[#allocation8 + $0x20] sm:$0xff]
    %v124 = vld [vmem:[#allocation8 + $0x28] sm:$0xff]
    %v125 = vld [vmem:[#allocation8 + $0x30] sm:$0xff]
    %v126 = vld [vmem:[#allocation8 + $0x38] sm:$0xff]
    %v127 = vld [vmem:[#allocation8 + $0x40] sm:$0xff]
    %v128 = vld [vmem:[#allocation8 + $0x48] sm:$0xff]
    %v129 = vld [vmem:[#allocation8 + $0x50] sm:$0xff]
    %v130 = vld [vmem:[#allocation8 + $0x58] sm:$0xff]
    %v131 = vld [vmem:[#allocation8 + $0x60] sm:$0xff]
    %v132 = vld [vmem:[#allocation8 + $0x68] sm:$0xff]
    %v133 = vld [vmem:[#allocation8 + $0x70] sm:$0xff]
    %v134 = vld [vmem:[#allocation8 + $0x78] sm:$0xff]
    %v135 = vld [vmem:[#allocation10] sm:$0x1]
    %vm136 = vcmask 130048
    %v138 = vsel %vm136, %v99, 0
    %v141 = vsel %vm136, %v100, 0
    %143 = vmatpush.msra.mxu0 0.0
    %144 = vmatpush.msra.mxu0 0.0
    %145 = vmatpush.msra.mxu0 0.0
    %146 = vmatpush.msra.mxu0 0.0
    %147 = vmatpush.msra.mxu0 0.0
    %148 = vmatpush.msra.mxu0 0.0
    %149 = vmatpush.msra.mxu0 0.0
    %150 = vmatpush.msra.mxu0 0.0
    %151 = vmatpush.msra.mxu0 0.0
    %152 = vmatpush.msra.mxu0 0.0
    %153 = vmatpush.msra.mxu0 0.0
    %154 = vmatpush.msra.mxu0 0.0
    %155 = vmatpush.msra.mxu0 0.0
    %156 = vmatpush.msra.mxu0 0.0
    %157 = vmatpush.msra.mxu0 %v102
    %158 = vmatpush.msra.mxu0 %v101
    %159 = vmatmul.f32.gmra.mxu0 %v138
    %v160 = vpop.f32.mrf.mxu0
    %v161 = vadd.f32 0.0, %v160
    %162 = vmatmul.f32.gmra.mxu0 %v141
    %v163 = vpop.f32.mrf.mxu0
    %v164 = vadd.f32 0.0, %v163
    %165 = vdwg.mxu0
    %166 = vmatpush.msra.mxu0 %v134
    %167 = vmatpush.msra.mxu0 %v133
    %168 = vmatpush.msra.mxu0 %v132
    %169 = vmatpush.msra.mxu0 %v131
    %170 = vmatpush.msra.mxu0 %v130
    %171 = vmatpush.msra.mxu0 %v129
    %172 = vmatpush.msra.mxu0 %v128
    %173 = vmatpush.msra.mxu0 %v127
    %174 = vmatpush.msra.mxu0 %v126
    %175 = vmatpush.msra.mxu0 %v125
    %176 = vmatpush.msra.mxu0 %v124
    %177 = vmatpush.msra.mxu0 %v123
    %178 = vmatpush.msra.mxu0 %v122
    %179 = vmatpush.msra.mxu0 %v121
    %180 = vmatpush.msra.mxu0 %v120
    %181 = vmatpush.msra.mxu0 %v119
    %182 = vmatmul.f32.gmra.mxu0 %v161
    %v183 = vpop.f32.mrf.mxu0
    %v184 = vadd.f32 0.0, %v183
    %185 = vmatmul.f32.gmra.mxu0 %v164
    %v186 = vpop.f32.mrf.mxu0
    %v187 = vadd.f32 0.0, %v186
    %188 = vdwg.mxu0
    %189 = vmatpush.msra.mxu0 %v118
    %190 = vmatpush.msra.mxu0 %v117
    %191 = vmatpush.msra.mxu0 %v116
    %192 = vmatpush.msra.mxu0 %v115
    %193 = vmatpush.msra.mxu0 %v114
    %194 = vmatpush.msra.mxu0 %v113
    %195 = vmatpush.msra.mxu0 %v112
    %196 = vmatpush.msra.mxu0 %v111
    %197 = vmatpush.msra.mxu0 %v110
    %198 = vmatpush.msra.mxu0 %v109
    %199 = vmatpush.msra.mxu0 %v108
    %200 = vmatpush.msra.mxu0 %v107
    %201 = vmatpush.msra.mxu0 %v106
    %202 = vmatpush.msra.mxu0 %v105
    %203 = vmatpush.msra.mxu0 %v104
    %204 = vmatpush.msra.mxu0 %v103
    %205 = vmatmul.f32.gmra.mxu0 %v101
    %v206 = vpop.f32.mrf.mxu0
    %v207 = vadd.f32 %v184, %v206
    %208 = vmatmul.f32.gmra.mxu0 %v102
    %v209 = vpop.f32.mrf.mxu0
    %v210 = vadd.f32 %v187, %v209
    %211 = vdwg.mxu0
    %v213 = vperm.slane %v135, 0
    %v215 = vadd.f32 %v207, %v213
    %v216 = vadd.f32 %v210, %v213
    %v217 = vmax.f32 %v215, 0.0
    %v218 = vmax.f32 %v216, 0.0
    %v219 = vmul.f32 %v217, %v217
    %v220 = vmul.f32 %v218, %v218
    %221 = vadd.xlane.f32.xlu0 %v219
    %v222 = vpop.xlane.xlu0 %221
    %223 = vadd.xlane.f32.xlu0 %v220
    %v224 = vpop.xlane.xlu0 %223
    %v225 = vmax.f32 %v222, 1e-24
    %v226 = vmax.f32 %v224, 1e-24
    %v227 = vrsqrt.pop %v225
    %v228 = vmul.f32 %v227, %v225
    %v229 = vmul.f32 %v228, %v227
    %v230 = vmul.f32 0.5, %v229
    %v231 = vsub.f32 1.5, %v230
    %v232 = vmul.f32 %v227, %v231
    %vm233 = vweird.f32 %v225
    %vm234 = vweird.f32 %v227
    %vm235 = vmor %vm233, %vm234
    %v236 = vsel %vm235, %v227, %v232
    %v237 = vrsqrt.pop %v226
    %v238 = vmul.f32 %v237, %v226
    %v239 = vmul.f32 %v238, %v237
    %v240 = vmul.f32 0.5, %v239
    %v241 = vsub.f32 1.5, %v240
    %v242 = vmul.f32 %v237, %v241
    %vm243 = vweird.f32 %v226
    %vm244 = vweird.f32 %v237
    %vm245 = vmor %vm243, %vm244
    %v246 = vsel %vm245, %v237, %v242
    %v247 = vmul.f32 %v217, %v236
    %v248 = vmul.f32 %v218, %v246
    %s249 = scalar_lea.vmem [#allocation7], 128
    %v250 = vld [vmem:[%s249] sm:$0xff]
    %v251 = vld [vmem:[%s249 + $0x8] sm:$0xff]
    %v252 = vld [vmem:[%s249 + $0x10] sm:$0xff]
    %v253 = vld [vmem:[%s249 + $0x18] sm:$0xff]
    %v254 = vld [vmem:[%s249 + $0x20] sm:$0xff]
    %v255 = vld [vmem:[%s249 + $0x28] sm:$0xff]
    %v256 = vld [vmem:[%s249 + $0x30] sm:$0xff]
    %v257 = vld [vmem:[%s249 + $0x38] sm:$0xff]
    %v258 = vld [vmem:[%s249 + $0x40] sm:$0xff]
    %v259 = vld [vmem:[%s249 + $0x48] sm:$0xff]
    %v260 = vld [vmem:[%s249 + $0x50] sm:$0xff]
    %v261 = vld [vmem:[%s249 + $0x58] sm:$0xff]
    %v262 = vld [vmem:[%s249 + $0x60] sm:$0xff]
    %v263 = vld [vmem:[%s249 + $0x68] sm:$0xff]
    %v264 = vld [vmem:[%s249 + $0x70] sm:$0xff]
    %v265 = vld [vmem:[%s249 + $0x78] sm:$0xff]
    %s266 = scalar_lea.vmem [#allocation8], 128
    %v267 = vld [vmem:[%s266] sm:$0xff]
    %v268 = vld [vmem:[%s266 + $0x8] sm:$0xff]
    %v269 = vld [vmem:[%s266 + $0x10] sm:$0xff]
    %v270 = vld [vmem:[%s266 + $0x18] sm:$0xff]
    %v271 = vld [vmem:[%s266 + $0x20] sm:$0xff]
    %v272 = vld [vmem:[%s266 + $0x28] sm:$0xff]
    %v273 = vld [vmem:[%s266 + $0x30] sm:$0xff]
    %v274 = vld [vmem:[%s266 + $0x38] sm:$0xff]
    %v275 = vld [vmem:[%s266 + $0x40] sm:$0xff]
    %v276 = vld [vmem:[%s266 + $0x48] sm:$0xff]
    %v277 = vld [vmem:[%s266 + $0x50] sm:$0xff]
    %v278 = vld [vmem:[%s266 + $0x58] sm:$0xff]
    %v279 = vld [vmem:[%s266 + $0x60] sm:$0xff]
    %v280 = vld [vmem:[%s266 + $0x68] sm:$0xff]
    %v281 = vld [vmem:[%s266 + $0x70] sm:$0xff]
    %v282 = vld [vmem:[%s266 + $0x78] sm:$0xff]
    %s283 = scalar_lea.vmem [#allocation10], 1
    %v284 = vld [vmem:[%s283] sm:$0x1]
    %285 = vmatpush.msra.mxu0 0.0
    %286 = vmatpush.msra.mxu0 0.0
    %287 = vmatpush.msra.mxu0 0.0
    %288 = vmatpush.msra.mxu0 0.0
    %289 = vmatpush.msra.mxu0 0.0
    %290 = vmatpush.msra.mxu0 0.0
    %291 = vmatpush.msra.mxu0 0.0
    %292 = vmatpush.msra.mxu0 0.0
    %293 = vmatpush.msra.mxu0 0.0
    %294 = vmatpush.msra.mxu0 0.0
    %295 = vmatpush.msra.mxu0 0.0
    %296 = vmatpush.msra.mxu0 0.0
    %297 = vmatpush.msra.mxu0 0.0
    %298 = vmatpush.msra.mxu0 0.0
    %299 = vmatpush.msra.mxu0 %v248
    %300 = vmatpush.msra.mxu0 %v247
    %301 = vmatmul.f32.gmra.mxu0 %v138
    %v302 = vpop.f32.mrf.mxu0
    %v303 = vadd.f32 0.0, %v302
    %304 = vmatmul.f32.gmra.mxu0 %v141
    %v305 = vpop.f32.mrf.mxu0
    %v306 = vadd.f32 0.0, %v305
    %307 = vdwg.mxu0
    %308 = vmatpush.msra.mxu0 %v282
    %309 = vmatpush.msra.mxu0 %v281
    %310 = vmatpush.msra.mxu0 %v280
    %311 = vmatpush.msra.mxu0 %v279
    %312 = vmatpush.msra.mxu0 %v278
    %313 = vmatpush.msra.mxu0 %v277
    %314 = vmatpush.msra.mxu0 %v276
    %315 = vmatpush.msra.mxu0 %v275
    %316 = vmatpush.msra.mxu0 %v274
    %317 = vmatpush.msra.mxu0 %v273
    %318 = vmatpush.msra.mxu0 %v272
    %319 = vmatpush.msra.mxu0 %v271
    %320 = vmatpush.msra.mxu0 %v270
    %321 = vmatpush.msra.mxu0 %v269
    %322 = vmatpush.msra.mxu0 %v268
    %323 = vmatpush.msra.mxu0 %v267
    %324 = vmatmul.f32.gmra.mxu0 %v303
    %v325 = vpop.f32.mrf.mxu0
    %v326 = vadd.f32 0.0, %v325
    %327 = vmatmul.f32.gmra.mxu0 %v306
    %v328 = vpop.f32.mrf.mxu0
    %v329 = vadd.f32 0.0, %v328
    %330 = vdwg.mxu0
    %331 = vmatpush.msra.mxu0 %v265
    %332 = vmatpush.msra.mxu0 %v264
    %333 = vmatpush.msra.mxu0 %v263
    %334 = vmatpush.msra.mxu0 %v262
    %335 = vmatpush.msra.mxu0 %v261
    %336 = vmatpush.msra.mxu0 %v260
    %337 = vmatpush.msra.mxu0 %v259
    %338 = vmatpush.msra.mxu0 %v258
    %339 = vmatpush.msra.mxu0 %v257
    %340 = vmatpush.msra.mxu0 %v256
    %341 = vmatpush.msra.mxu0 %v255
    %342 = vmatpush.msra.mxu0 %v254
    %343 = vmatpush.msra.mxu0 %v253
    %344 = vmatpush.msra.mxu0 %v252
    %345 = vmatpush.msra.mxu0 %v251
    %346 = vmatpush.msra.mxu0 %v250
    %347 = vmatmul.f32.gmra.mxu0 %v247
    %v348 = vpop.f32.mrf.mxu0
    %v349 = vadd.f32 %v326, %v348
    %350 = vmatmul.f32.gmra.mxu0 %v248
    %v351 = vpop.f32.mrf.mxu0
    %v352 = vadd.f32 %v329, %v351
    %353 = vdwg.mxu0
    %v355 = vperm.slane %v284, 0
    %v357 = vadd.f32 %v349, %v355
    %v358 = vadd.f32 %v352, %v355
    %v359 = vmax.f32 %v357, 0.0
    %v360 = vmax.f32 %v358, 0.0
    %v361 = vmul.f32 %v359, %v359
    %v362 = vmul.f32 %v360, %v360
    %363 = vadd.xlane.f32.xlu0 %v361
    %v364 = vpop.xlane.xlu0 %363
    %365 = vadd.xlane.f32.xlu0 %v362
    %v366 = vpop.xlane.xlu0 %365
    %v367 = vmax.f32 %v364, 1e-24
    %v368 = vmax.f32 %v366, 1e-24
    %v369 = vrsqrt.pop %v367
    %v370 = vmul.f32 %v369, %v367
    %v371 = vmul.f32 %v370, %v369
    %v372 = vmul.f32 0.5, %v371
    %v373 = vsub.f32 1.5, %v372
    %v374 = vmul.f32 %v369, %v373
    %vm375 = vweird.f32 %v367
    %vm376 = vweird.f32 %v369
    %vm377 = vmor %vm375, %vm376
    %v378 = vsel %vm377, %v369, %v374
    %v379 = vrsqrt.pop %v368
    %v380 = vmul.f32 %v379, %v368
    %v381 = vmul.f32 %v380, %v379
    %v382 = vmul.f32 0.5, %v381
    %v383 = vsub.f32 1.5, %v382
    %v384 = vmul.f32 %v379, %v383
    %vm385 = vweird.f32 %v368
    %vm386 = vweird.f32 %v379
    %vm387 = vmor %vm385, %vm386
    %v388 = vsel %vm387, %v379, %v384
    %v389 = vmul.f32 %v359, %v378
    %v390 = vmul.f32 %v360, %v388
    %s391 = scalar_lea.vmem [#allocation7], 256
    %v392 = vld [vmem:[%s391] sm:$0xff]
    %v393 = vld [vmem:[%s391 + $0x8] sm:$0xff]
    %v394 = vld [vmem:[%s391 + $0x10] sm:$0xff]
    %v395 = vld [vmem:[%s391 + $0x18] sm:$0xff]
    %v396 = vld [vmem:[%s391 + $0x20] sm:$0xff]
    %v397 = vld [vmem:[%s391 + $0x28] sm:$0xff]
    %v398 = vld [vmem:[%s391 + $0x30] sm:$0xff]
    %v399 = vld [vmem:[%s391 + $0x38] sm:$0xff]
    %v400 = vld [vmem:[%s391 + $0x40] sm:$0xff]
    %v401 = vld [vmem:[%s391 + $0x48] sm:$0xff]
    %v402 = vld [vmem:[%s391 + $0x50] sm:$0xff]
    %v403 = vld [vmem:[%s391 + $0x58] sm:$0xff]
    %v404 = vld [vmem:[%s391 + $0x60] sm:$0xff]
    %v405 = vld [vmem:[%s391 + $0x68] sm:$0xff]
    %v406 = vld [vmem:[%s391 + $0x70] sm:$0xff]
    %v407 = vld [vmem:[%s391 + $0x78] sm:$0xff]
    %s408 = scalar_lea.vmem [#allocation8], 256
    %v409 = vld [vmem:[%s408] sm:$0xff]
    %v410 = vld [vmem:[%s408 + $0x8] sm:$0xff]
    %v411 = vld [vmem:[%s408 + $0x10] sm:$0xff]
    %v412 = vld [vmem:[%s408 + $0x18] sm:$0xff]
    %v413 = vld [vmem:[%s408 + $0x20] sm:$0xff]
    %v414 = vld [vmem:[%s408 + $0x28] sm:$0xff]
    %v415 = vld [vmem:[%s408 + $0x30] sm:$0xff]
    %v416 = vld [vmem:[%s408 + $0x38] sm:$0xff]
    %v417 = vld [vmem:[%s408 + $0x40] sm:$0xff]
    %v418 = vld [vmem:[%s408 + $0x48] sm:$0xff]
    %v419 = vld [vmem:[%s408 + $0x50] sm:$0xff]
    %v420 = vld [vmem:[%s408 + $0x58] sm:$0xff]
    %v421 = vld [vmem:[%s408 + $0x60] sm:$0xff]
    %v422 = vld [vmem:[%s408 + $0x68] sm:$0xff]
    %v423 = vld [vmem:[%s408 + $0x70] sm:$0xff]
    %v424 = vld [vmem:[%s408 + $0x78] sm:$0xff]
    %s425 = scalar_lea.vmem [#allocation10], 2
    %v426 = vld [vmem:[%s425] sm:$0x1]
    %427 = vmatpush.msra.mxu0 0.0
    %428 = vmatpush.msra.mxu0 0.0
    %429 = vmatpush.msra.mxu0 0.0
    %430 = vmatpush.msra.mxu0 0.0
    %431 = vmatpush.msra.mxu0 0.0
    %432 = vmatpush.msra.mxu0 0.0
    %433 = vmatpush.msra.mxu0 0.0
    %434 = vmatpush.msra.mxu0 0.0
    %435 = vmatpush.msra.mxu0 0.0
    %436 = vmatpush.msra.mxu0 0.0
    %437 = vmatpush.msra.mxu0 0.0
    %438 = vmatpush.msra.mxu0 0.0
    %439 = vmatpush.msra.mxu0 0.0
    %440 = vmatpush.msra.mxu0 0.0
    %441 = vmatpush.msra.mxu0 %v390
    %442 = vmatpush.msra.mxu0 %v389
    %443 = vmatmul.f32.gmra.mxu0 %v138
    %v444 = vpop.f32.mrf.mxu0
    %v445 = vadd.f32 0.0, %v444
    %446 = vmatmul.f32.gmra.mxu0 %v141
    %v447 = vpop.f32.mrf.mxu0
    %v448 = vadd.f32 0.0, %v447
    %449 = vdwg.mxu0
    %450 = vmatpush.msra.mxu0 %v424
    %451 = vmatpush.msra.mxu0 %v423
    %452 = vmatpush.msra.mxu0 %v422
    %453 = vmatpush.msra.mxu0 %v421
    %454 = vmatpush.msra.mxu0 %v420
    %455 = vmatpush.msra.mxu0 %v419
    %456 = vmatpush.msra.mxu0 %v418
    %457 = vmatpush.msra.mxu0 %v417
    %458 = vmatpush.msra.mxu0 %v416
    %459 = vmatpush.msra.mxu0 %v415
    %460 = vmatpush.msra.mxu0 %v414
    %461 = vmatpush.msra.mxu0 %v413
    %462 = vmatpush.msra.mxu0 %v412
    %463 = vmatpush.msra.mxu0 %v411
    %464 = vmatpush.msra.mxu0 %v410
    %465 = vmatpush.msra.mxu0 %v409
    %466 = vmatmul.f32.gmra.mxu0 %v445
    %v467 = vpop.f32.mrf.mxu0
    %v468 = vadd.f32 0.0, %v467
    %469 = vmatmul.f32.gmra.mxu0 %v448
    %v470 = vpop.f32.mrf.mxu0
    %v471 = vadd.f32 0.0, %v470
    %472 = vdwg.mxu0
    %473 = vmatpush.msra.mxu0 %v407
    %474 = vmatpush.msra.mxu0 %v406
    %475 = vmatpush.msra.mxu0 %v405
    %476 = vmatpush.msra.mxu0 %v404
    %477 = vmatpush.msra.mxu0 %v403
    %478 = vmatpush.msra.mxu0 %v402
    %479 = vmatpush.msra.mxu0 %v401
    %480 = vmatpush.msra.mxu0 %v400
    %481 = vmatpush.msra.mxu0 %v399
    %482 = vmatpush.msra.mxu0 %v398
    %483 = vmatpush.msra.mxu0 %v397
    %484 = vmatpush.msra.mxu0 %v396
    %485 = vmatpush.msra.mxu0 %v395
    %486 = vmatpush.msra.mxu0 %v394
    %487 = vmatpush.msra.mxu0 %v393
    %488 = vmatpush.msra.mxu0 %v392
    %489 = vmatmul.f32.gmra.mxu0 %v389
    %v490 = vpop.f32.mrf.mxu0
    %v491 = vadd.f32 %v468, %v490
    %492 = vmatmul.f32.gmra.mxu0 %v390
    %v493 = vpop.f32.mrf.mxu0
    %v494 = vadd.f32 %v471, %v493
    %495 = vdwg.mxu0
    %v497 = vperm.slane %v426, 0
    %v499 = vadd.f32 %v491, %v497
    %v500 = vadd.f32 %v494, %v497
    %v501 = vmax.f32 %v499, 0.0
    %v502 = vmax.f32 %v500, 0.0
    %v503 = vmul.f32 %v501, %v501
    %v504 = vmul.f32 %v502, %v502
    %505 = vadd.xlane.f32.xlu0 %v503
    %v506 = vpop.xlane.xlu0 %505
    %507 = vadd.xlane.f32.xlu0 %v504
    %v508 = vpop.xlane.xlu0 %507
    %v509 = vmax.f32 %v506, 1e-24
    %v510 = vmax.f32 %v508, 1e-24
    %v511 = vrsqrt.pop %v509
    %v512 = vmul.f32 %v511, %v509
    %v513 = vmul.f32 %v512, %v511
    %v514 = vmul.f32 0.5, %v513
    %v515 = vsub.f32 1.5, %v514
    %v516 = vmul.f32 %v511, %v515
    %vm517 = vweird.f32 %v509
    %vm518 = vweird.f32 %v511
    %vm519 = vmor %vm517, %vm518
    %v520 = vsel %vm519, %v511, %v516
    %v521 = vrsqrt.pop %v510
    %v522 = vmul.f32 %v521, %v510
    %v523 = vmul.f32 %v522, %v521
    %v524 = vmul.f32 0.5, %v523
    %v525 = vsub.f32 1.5, %v524
    %v526 = vmul.f32 %v521, %v525
    %vm527 = vweird.f32 %v510
    %vm528 = vweird.f32 %v521
    %vm529 = vmor %vm527, %vm528
    %v530 = vsel %vm529, %v521, %v526
    %v531 = vmul.f32 %v501, %v520
    %v532 = vmul.f32 %v502, %v530
    %s533 = scalar_lea.vmem [#allocation7], 384
    %v534 = vld [vmem:[%s533] sm:$0xff]
    %v535 = vld [vmem:[%s533 + $0x8] sm:$0xff]
    %v536 = vld [vmem:[%s533 + $0x10] sm:$0xff]
    %v537 = vld [vmem:[%s533 + $0x18] sm:$0xff]
    %v538 = vld [vmem:[%s533 + $0x20] sm:$0xff]
    %v539 = vld [vmem:[%s533 + $0x28] sm:$0xff]
    %v540 = vld [vmem:[%s533 + $0x30] sm:$0xff]
    %v541 = vld [vmem:[%s533 + $0x38] sm:$0xff]
    %v542 = vld [vmem:[%s533 + $0x40] sm:$0xff]
    %v543 = vld [vmem:[%s533 + $0x48] sm:$0xff]
    %v544 = vld [vmem:[%s533 + $0x50] sm:$0xff]
    %v545 = vld [vmem:[%s533 + $0x58] sm:$0xff]
    %v546 = vld [vmem:[%s533 + $0x60] sm:$0xff]
    %v547 = vld [vmem:[%s533 + $0x68] sm:$0xff]
    %v548 = vld [vmem:[%s533 + $0x70] sm:$0xff]
    %v549 = vld [vmem:[%s533 + $0x78] sm:$0xff]
    %s550 = scalar_lea.vmem [#allocation8], 384
    %v551 = vld [vmem:[%s550] sm:$0xff]
    %v552 = vld [vmem:[%s550 + $0x8] sm:$0xff]
    %v553 = vld [vmem:[%s550 + $0x10] sm:$0xff]
    %v554 = vld [vmem:[%s550 + $0x18] sm:$0xff]
    %v555 = vld [vmem:[%s550 + $0x20] sm:$0xff]
    %v556 = vld [vmem:[%s550 + $0x28] sm:$0xff]
    %v557 = vld [vmem:[%s550 + $0x30] sm:$0xff]
    %v558 = vld [vmem:[%s550 + $0x38] sm:$0xff]
    %v559 = vld [vmem:[%s550 + $0x40] sm:$0xff]
    %v560 = vld [vmem:[%s550 + $0x48] sm:$0xff]
    %v561 = vld [vmem:[%s550 + $0x50] sm:$0xff]
    %v562 = vld [vmem:[%s550 + $0x58] sm:$0xff]
    %v563 = vld [vmem:[%s550 + $0x60] sm:$0xff]
    %v564 = vld [vmem:[%s550 + $0x68] sm:$0xff]
    %v565 = vld [vmem:[%s550 + $0x70] sm:$0xff]
    %v566 = vld [vmem:[%s550 + $0x78] sm:$0xff]
    %s567 = scalar_lea.vmem [#allocation10], 3
    %v568 = vld [vmem:[%s567] sm:$0x1]
    %569 = vmatpush.msra.mxu0 0.0
    %570 = vmatpush.msra.mxu0 0.0
    %571 = vmatpush.msra.mxu0 0.0
    %572 = vmatpush.msra.mxu0 0.0
    %573 = vmatpush.msra.mxu0 0.0
    %574 = vmatpush.msra.mxu0 0.0
    %575 = vmatpush.msra.mxu0 0.0
    %576 = vmatpush.msra.mxu0 0.0
    %577 = vmatpush.msra.mxu0 0.0
    %578 = vmatpush.msra.mxu0 0.0
    %579 = vmatpush.msra.mxu0 0.0
    %580 = vmatpush.msra.mxu0 0.0
    %581 = vmatpush.msra.mxu0 0.0
    %582 = vmatpush.msra.mxu0 0.0
    %583 = vmatpush.msra.mxu0 %v532
    %584 = vmatpush.msra.mxu0 %v531
    %585 = vmatmul.f32.gmra.mxu0 %v138
    %v586 = vpop.f32.mrf.mxu0
    %v587 = vadd.f32 0.0, %v586
    %588 = vmatmul.f32.gmra.mxu0 %v141
    %v589 = vpop.f32.mrf.mxu0
    %v590 = vadd.f32 0.0, %v589
    %591 = vdwg.mxu0
    %592 = vmatpush.msra.mxu0 %v566
    %593 = vmatpush.msra.mxu0 %v565
    %594 = vmatpush.msra.mxu0 %v564
    %595 = vmatpush.msra.mxu0 %v563
    %596 = vmatpush.msra.mxu0 %v562
    %597 = vmatpush.msra.mxu0 %v561
    %598 = vmatpush.msra.mxu0 %v560
    %599 = vmatpush.msra.mxu0 %v559
    %600 = vmatpush.msra.mxu0 %v558
    %601 = vmatpush.msra.mxu0 %v557
    %602 = vmatpush.msra.mxu0 %v556
    %603 = vmatpush.msra.mxu0 %v555
    %604 = vmatpush.msra.mxu0 %v554
    %605 = vmatpush.msra.mxu0 %v553
    %606 = vmatpush.msra.mxu0 %v552
    %607 = vmatpush.msra.mxu0 %v551
    %608 = vmatmul.f32.gmra.mxu0 %v587
    %v609 = vpop.f32.mrf.mxu0
    %v610 = vadd.f32 0.0, %v609
    %611 = vmatmul.f32.gmra.mxu0 %v590
    %v612 = vpop.f32.mrf.mxu0
    %v613 = vadd.f32 0.0, %v612
    %614 = vdwg.mxu0
    %615 = vmatpush.msra.mxu0 %v549
    %616 = vmatpush.msra.mxu0 %v548
    %617 = vmatpush.msra.mxu0 %v547
    %618 = vmatpush.msra.mxu0 %v546
    %619 = vmatpush.msra.mxu0 %v545
    %620 = vmatpush.msra.mxu0 %v544
    %621 = vmatpush.msra.mxu0 %v543
    %622 = vmatpush.msra.mxu0 %v542
    %623 = vmatpush.msra.mxu0 %v541
    %624 = vmatpush.msra.mxu0 %v540
    %625 = vmatpush.msra.mxu0 %v539
    %626 = vmatpush.msra.mxu0 %v538
    %627 = vmatpush.msra.mxu0 %v537
    %628 = vmatpush.msra.mxu0 %v536
    %629 = vmatpush.msra.mxu0 %v535
    %630 = vmatpush.msra.mxu0 %v534
    %631 = vmatmul.f32.gmra.mxu0 %v531
    %v632 = vpop.f32.mrf.mxu0
    %v633 = vadd.f32 %v610, %v632
    %634 = vmatmul.f32.gmra.mxu0 %v532
    %v635 = vpop.f32.mrf.mxu0
    %v636 = vadd.f32 %v613, %v635
    %637 = vdwg.mxu0
    %v639 = vperm.slane %v568, 0
    %v641 = vadd.f32 %v633, %v639
    %v642 = vadd.f32 %v636, %v639
    %643 = vst [vmem:[#allocation11] sm:$0xff] %v641
    %644 = vst [vmem:[#allocation11 + $0x8] sm:$0xff] %v642
    // Predicated region
    $region42: #{tpu_custom_call.1} parent=1 // pred_check
      _
    $region43: #{tpu_custom_call.1} parent=1 // pred_check_branch
      %646 = sbr.rel (0) target = $region45
    $region44: #{tpu_custom_call.1} parent=1 // pred_region
      %648 = vsyncadd [#allocation4], 0
      %s649 = sshll.u32 [#allocation11], 4
      %s650 = int_to_ptr.vmem [resolvable:$true] %s649
      %s651 = sshll.u32 %s5, 4
      %s652 = int_to_ptr.hbm [resolvable:$true] %s651
      %657 = dma.vmem_to_hbm [thread:$0]  %s650, 256, %s652, [#allocation4], 128, 128, 8
    $region45: #{tpu_custom_call.1} parent=1 // pred_fallthru
      _
    // Predicated region
    $region46: #{tpu_custom_call.1} parent=1 // pred_check
      _
    $region47: #{tpu_custom_call.1} parent=1 // pred_check_branch
      %659 = sbr.rel (0) target = $region49
    $region48: #{tpu_custom_call.1} parent=1 // pred_region
      %661 = dma.done [#allocation4], 256
    $region49: #{tpu_custom_call.1} parent=1 // pred_fallthru
      _
    %662 = vsyncpa [#allocation3], 1
    %663 = vsyncpa [#allocation6], 1
    %664 = vsyncpa [#allocation9], 1
    %665 = vsyncpa [#allocation4], 1

</llo_original>
